<compile_context>
chip_gen: v7x
topology: tpu7x:2x2x1
jax: 0.10.0
libtpu: 0.0.40
codegen_flags: <defaults>
</compile_context>

<pallas_src>
import jax
import jax.numpy as jnp
from jax.experimental import pallas as pl
from jax.experimental.pallas import tpu as pltpu  # noqa: F401  (TPU backend)

BN_EPS = 1e-5
LEAKY_SLOPE = 0.2
PAD = 128  # lane width every feature dim is padded to


def _mlp_kernel(x_ref, w_ref, v_ref, o_ref):
    """x_ref: (B,128)  w_ref: (512,128) packed weights  v_ref: (8,128) packed vectors."""
    f32 = jnp.float32
    h = x_ref[...].astype(f32)

    def bn_layer(h, k):
        # static sub-views of the packed slabs (zero runtime cost)
        w = w_ref[k * PAD:(k + 1) * PAD, :]
        gamma = v_ref[2 * k:2 * k + 1, :]
        beta = v_ref[2 * k + 1:2 * k + 2, :]
        h = jnp.dot(h, w, preferred_element_type=f32)          # MXU
        # training-mode BN, biased variance; affine folded into scale/shift
        mean = jnp.mean(h, axis=0, keepdims=True)
        var = jnp.mean(h * h, axis=0, keepdims=True) - mean * mean
        scale = gamma * jax.lax.rsqrt(var + BN_EPS)             # rsqrt -> EUP slot
        shift = beta - mean * scale
        h = h * scale + shift
        return jnp.maximum(h, LEAKY_SLOPE * h)                  # LeakyReLU(0.2)

    h = bn_layer(h, 0)
    h = bn_layer(h, 1)
    h = bn_layer(h, 2)

    wo = w_ref[3 * PAD:4 * PAD, :]
    bo = v_ref[6:7, :]
    o_ref[...] = (jnp.dot(h, wo, preferred_element_type=f32) + bo).astype(o_ref.dtype)


def pack_params(params):
    """Pack the 14 raw parameter arrays into two lane-padded VMEM-friendly slabs.

    Hidden-layer Linear biases b1/b2/b3 are intentionally omitted: they are exactly
    cancelled by the BatchNorm mean subtraction.
    """
    (w1, _b1, g1, be1, w2, _b2, g2, be2, w3, _b3, g3, be3, wo, bo) = params

    def pad_w(w):
        assert w.shape[0] <= PAD and w.shape[1] <= PAD
        return jnp.pad(w, ((0, PAD - w.shape[0]), (0, PAD - w.shape[1])))

    def pad_v(v):
        return jnp.pad(v, ((0, 0), (0, PAD - v.shape[1])))

    w_slab = jnp.concatenate([pad_w(w1), pad_w(w2), pad_w(w3), pad_w(wo)], axis=0)  # (512,128)
    v_rows = [pad_v(g1), pad_v(be1), pad_v(g2), pad_v(be2),
              pad_v(g3), pad_v(be3), pad_v(bo), jnp.zeros((1, PAD), jnp.float32)]
    v_slab = jnp.concatenate(v_rows, axis=0)                                        # (8,128)
    return w_slab, v_slab


def h2_cushion_rom_forward(x, packed, out_features):
    """x: (B, in_features) float32.  packed = pack_params(params)."""
    w_slab, v_slab = packed
    batch, in_features = x.shape
    assert in_features <= PAD, "ROM expects a small flattened parameter vector"
    x_p = jnp.pad(x, ((0, 0), (0, PAD - in_features)))

    full = lambda a: pl.BlockSpec(a.shape, lambda: (0,) * a.ndim)

    out = pl.pallas_call(
        _mlp_kernel,
        out_shape=jax.ShapeDtypeStruct((batch, PAD), jnp.float32),
        grid=(),
        in_specs=[full(x_p), full(w_slab), full(v_slab)],
        out_specs=pl.BlockSpec((batch, PAD), lambda: (0, 0)),
    )(x_p, w_slab, v_slab)
    return out[:, :out_features]


def init_params(key, in_features, out_features, hidden_sizes=(128, 64, 16)):
    """Deterministic init mirroring torch defaults (Linear: U(-1/sqrt(fan_in),+); BN: g=1,b=0)."""
    layer_sizes = [in_features] + list(hidden_sizes)
    params = []
    for din, dout in zip(layer_sizes[:-1], layer_sizes[1:]):
        key, kw, kb = jax.random.split(key, 3)
        bound = 1.0 / jnp.sqrt(din)
        w = jax.random.uniform(kw, (din, dout), jnp.float32, -bound, bound)
        b = jax.random.uniform(kb, (1, dout), jnp.float32, -bound, bound)
        params += [w, b, jnp.ones((1, dout), jnp.float32), jnp.zeros((1, dout), jnp.float32)]
    key, kw, kb = jax.random.split(key, 3)
    din = hidden_sizes[-1]
    bound = 1.0 / jnp.sqrt(din)
    wo = jax.random.uniform(kw, (din, out_features), jnp.float32, -bound, bound)
    bo = jax.random.uniform(kb, (1, out_features), jnp.float32, -bound, bound)
    params += [wo, bo]
    return tuple(params)


def reference_forward(x, params):
    """Pure-JAX reference (keeps the hidden biases + two-pass variance, like torch)."""
    (w1, b1, g1, be1, w2, b2, g2, be2, w3, b3, g3, be3, wo, bo) = params
    h = x
    for w, b, g, be in ((w1, b1, g1, be1), (w2, b2, g2, be2), (w3, b3, g3, be3)):
        h = h @ w + b
        mean = jnp.mean(h, axis=0, keepdims=True)
        var = jnp.mean((h - mean) ** 2, axis=0, keepdims=True)
        h = (h - mean) * jax.lax.rsqrt(var + BN_EPS) * g + be
        h = jnp.where(h > 0, h, LEAKY_SLOPE * h)
    return h @ wo + bo


if __name__ == "__main__":
    batch = 8
    in_features = 32        # geologic + operational parameters (flattened)
    out_features = 4        # [efft, ymft, gwrt, J]

    key = jax.random.PRNGKey(0)
    key, kx = jax.random.split(key)
    x = jax.random.normal(kx, (batch, in_features), jnp.float32)
    params = init_params(key, in_features, out_features)

    packed = jax.tree_util.tree_map(jax.block_until_ready, pack_params(params))
    out = jax.block_until_ready(h2_cushion_rom_forward(x, packed, out_features))
    ref = reference_forward(x, params)

    assert out.shape == (batch, out_features)
    assert jnp.allclose(out, ref, atol=1e-4, rtol=1e-4), "mismatch vs reference"
    print("KERNEL_OK")
</pallas_src>

<mosaic_0001>
module attributes {stable_mosaic.version = 11 : i64} {
  func.func @_mlp_kernel(%arg0: memref<8x128xf32, #tpu.memory_space<vmem>>, %arg1: memref<512x128xf32, #tpu.memory_space<vmem>>, %arg2: memref<8x128xf32, #tpu.memory_space<vmem>>, %arg3: memref<8x128xf32, #tpu.memory_space<vmem>>) attributes {dimension_semantics = [], scalar_prefetch = 0 : i64, scratch_operands = 0 : i64, tpu.core_type = #tpu.core_type<tc>} {
    %c0 = arith.constant 0 : index
    %c0_0 = arith.constant 0 : index
    %0 = vector.load %arg0[%c0, %c0_0] : memref<8x128xf32, #tpu.memory_space<vmem>>, vector<8x128xf32>
    %c0_1 = arith.constant 0 : index
    %c0_2 = arith.constant 0 : index
    %1 = vector.load %arg1[%c0_1, %c0_2] : memref<512x128xf32, #tpu.memory_space<vmem>>, vector<128x128xf32>
    %c0_3 = arith.constant 0 : index
    %c0_4 = arith.constant 0 : index
    %2 = vector.load %arg2[%c0_3, %c0_4] : memref<8x128xf32, #tpu.memory_space<vmem>>, vector<1x128xf32>
    %c1 = arith.constant 1 : index
    %c0_5 = arith.constant 0 : index
    %3 = vector.load %arg2[%c1, %c0_5] : memref<8x128xf32, #tpu.memory_space<vmem>>, vector<1x128xf32>
    %cst = arith.constant dense<0.000000e+00> : vector<8x128xf32>
    %4 = tpu.matmul %0, %1, %cst {dimension_numbers = #tpu.dot_dimension_numbers<[1], [0], [0], [1], [0, 0, 1, 1], [], []>} : vector<8x128xf32>, vector<128x128xf32>, vector<8x128xf32> -> vector<8x128xf32>
    %cst_6 = arith.constant dense<0.000000e+00> : vector<128xf32>
    %5 = vector.multi_reduction <add>, %4, %cst_6 [0] : vector<8x128xf32> to vector<128xf32>
    %6 = vector.shape_cast %5 : vector<128xf32> to vector<1x128xf32>
    %cst_7 = arith.constant 8.000000e+00 : f32
    %7 = vector.broadcast %cst_7 : f32 to vector<1x128xf32>
    %8 = arith.divf %6, %7 : vector<1x128xf32>
    %9 = arith.mulf %4, %4 : vector<8x128xf32>
    %cst_8 = arith.constant dense<0.000000e+00> : vector<128xf32>
    %10 = vector.multi_reduction <add>, %9, %cst_8 [0] : vector<8x128xf32> to vector<128xf32>
    %11 = vector.shape_cast %10 : vector<128xf32> to vector<1x128xf32>
    %cst_9 = arith.constant 8.000000e+00 : f32
    %12 = vector.broadcast %cst_9 : f32 to vector<1x128xf32>
    %13 = arith.divf %11, %12 : vector<1x128xf32>
    %14 = arith.mulf %8, %8 : vector<1x128xf32>
    %15 = arith.subf %13, %14 : vector<1x128xf32>
    %cst_10 = arith.constant 9.99999974E-6 : f32
    %16 = vector.broadcast %cst_10 : f32 to vector<1x128xf32>
    %17 = arith.addf %15, %16 : vector<1x128xf32>
    %18 = math.rsqrt %17 : vector<1x128xf32>
    %19 = arith.mulf %2, %18 : vector<1x128xf32>
    %20 = arith.mulf %8, %19 : vector<1x128xf32>
    %21 = arith.subf %3, %20 : vector<1x128xf32>
    %22 = vector.broadcast %19 : vector<1x128xf32> to vector<8x128xf32>
    %23 = arith.mulf %4, %22 : vector<8x128xf32>
    %24 = vector.broadcast %21 : vector<1x128xf32> to vector<8x128xf32>
    %25 = arith.addf %23, %24 : vector<8x128xf32>
    %cst_11 = arith.constant 2.000000e-01 : f32
    %26 = vector.broadcast %cst_11 : f32 to vector<8x128xf32>
    %27 = arith.mulf %26, %25 : vector<8x128xf32>
    %28 = arith.maximumf %25, %27 : vector<8x128xf32>
    %c128 = arith.constant 128 : index
    %c0_12 = arith.constant 0 : index
    %29 = vector.load %arg1[%c128, %c0_12] : memref<512x128xf32, #tpu.memory_space<vmem>>, vector<128x128xf32>
    %c2 = arith.constant 2 : index
    %c0_13 = arith.constant 0 : index
    %30 = vector.load %arg2[%c2, %c0_13] : memref<8x128xf32, #tpu.memory_space<vmem>>, vector<1x128xf32>
    %c3 = arith.constant 3 : index
    %c0_14 = arith.constant 0 : index
    %31 = vector.load %arg2[%c3, %c0_14] : memref<8x128xf32, #tpu.memory_space<vmem>>, vector<1x128xf32>
    %cst_15 = arith.constant dense<0.000000e+00> : vector<8x128xf32>
    %32 = tpu.matmul %28, %29, %cst_15 {dimension_numbers = #tpu.dot_dimension_numbers<[1], [0], [0], [1], [0, 0, 1, 1], [], []>} : vector<8x128xf32>, vector<128x128xf32>, vector<8x128xf32> -> vector<8x128xf32>
    %cst_16 = arith.constant dense<0.000000e+00> : vector<128xf32>
    %33 = vector.multi_reduction <add>, %32, %cst_16 [0] : vector<8x128xf32> to vector<128xf32>
    %34 = vector.shape_cast %33 : vector<128xf32> to vector<1x128xf32>
    %cst_17 = arith.constant 8.000000e+00 : f32
    %35 = vector.broadcast %cst_17 : f32 to vector<1x128xf32>
    %36 = arith.divf %34, %35 : vector<1x128xf32>
    %37 = arith.mulf %32, %32 : vector<8x128xf32>
    %cst_18 = arith.constant dense<0.000000e+00> : vector<128xf32>
    %38 = vector.multi_reduction <add>, %37, %cst_18 [0] : vector<8x128xf32> to vector<128xf32>
    %39 = vector.shape_cast %38 : vector<128xf32> to vector<1x128xf32>
    %cst_19 = arith.constant 8.000000e+00 : f32
    %40 = vector.broadcast %cst_19 : f32 to vector<1x128xf32>
    %41 = arith.divf %39, %40 : vector<1x128xf32>
    %42 = arith.mulf %36, %36 : vector<1x128xf32>
    %43 = arith.subf %41, %42 : vector<1x128xf32>
    %cst_20 = arith.constant 9.99999974E-6 : f32
    %44 = vector.broadcast %cst_20 : f32 to vector<1x128xf32>
    %45 = arith.addf %43, %44 : vector<1x128xf32>
    %46 = math.rsqrt %45 : vector<1x128xf32>
    %47 = arith.mulf %30, %46 : vector<1x128xf32>
    %48 = arith.mulf %36, %47 : vector<1x128xf32>
    %49 = arith.subf %31, %48 : vector<1x128xf32>
    %50 = vector.broadcast %47 : vector<1x128xf32> to vector<8x128xf32>
    %51 = arith.mulf %32, %50 : vector<8x128xf32>
    %52 = vector.broadcast %49 : vector<1x128xf32> to vector<8x128xf32>
    %53 = arith.addf %51, %52 : vector<8x128xf32>
    %cst_21 = arith.constant 2.000000e-01 : f32
    %54 = vector.broadcast %cst_21 : f32 to vector<8x128xf32>
    %55 = arith.mulf %54, %53 : vector<8x128xf32>
    %56 = arith.maximumf %53, %55 : vector<8x128xf32>
    %c256 = arith.constant 256 : index
    %c0_22 = arith.constant 0 : index
    %57 = vector.load %arg1[%c256, %c0_22] : memref<512x128xf32, #tpu.memory_space<vmem>>, vector<128x128xf32>
    %c4 = arith.constant 4 : index
    %c0_23 = arith.constant 0 : index
    %58 = vector.load %arg2[%c4, %c0_23] : memref<8x128xf32, #tpu.memory_space<vmem>>, vector<1x128xf32>
    %c5 = arith.constant 5 : index
    %c0_24 = arith.constant 0 : index
    %59 = vector.load %arg2[%c5, %c0_24] : memref<8x128xf32, #tpu.memory_space<vmem>>, vector<1x128xf32>
    %cst_25 = arith.constant dense<0.000000e+00> : vector<8x128xf32>
    %60 = tpu.matmul %56, %57, %cst_25 {dimension_numbers = #tpu.dot_dimension_numbers<[1], [0], [0], [1], [0, 0, 1, 1], [], []>} : vector<8x128xf32>, vector<128x128xf32>, vector<8x128xf32> -> vector<8x128xf32>
    %cst_26 = arith.constant dense<0.000000e+00> : vector<128xf32>
    %61 = vector.multi_reduction <add>, %60, %cst_26 [0] : vector<8x128xf32> to vector<128xf32>
    %62 = vector.shape_cast %61 : vector<128xf32> to vector<1x128xf32>
    %cst_27 = arith.constant 8.000000e+00 : f32
    %63 = vector.broadcast %cst_27 : f32 to vector<1x128xf32>
    %64 = arith.divf %62, %63 : vector<1x128xf32>
    %65 = arith.mulf %60, %60 : vector<8x128xf32>
    %cst_28 = arith.constant dense<0.000000e+00> : vector<128xf32>
    %66 = vector.multi_reduction <add>, %65, %cst_28 [0] : vector<8x128xf32> to vector<128xf32>
    %67 = vector.shape_cast %66 : vector<128xf32> to vector<1x128xf32>
    %cst_29 = arith.constant 8.000000e+00 : f32
    %68 = vector.broadcast %cst_29 : f32 to vector<1x128xf32>
    %69 = arith.divf %67, %68 : vector<1x128xf32>
    %70 = arith.mulf %64, %64 : vector<1x128xf32>
    %71 = arith.subf %69, %70 : vector<1x128xf32>
    %cst_30 = arith.constant 9.99999974E-6 : f32
    %72 = vector.broadcast %cst_30 : f32 to vector<1x128xf32>
    %73 = arith.addf %71, %72 : vector<1x128xf32>
    %74 = math.rsqrt %73 : vector<1x128xf32>
    %75 = arith.mulf %58, %74 : vector<1x128xf32>
    %76 = arith.mulf %64, %75 : vector<1x128xf32>
    %77 = arith.subf %59, %76 : vector<1x128xf32>
    %78 = vector.broadcast %75 : vector<1x128xf32> to vector<8x128xf32>
    %79 = arith.mulf %60, %78 : vector<8x128xf32>
    %80 = vector.broadcast %77 : vector<1x128xf32> to vector<8x128xf32>
    %81 = arith.addf %79, %80 : vector<8x128xf32>
    %cst_31 = arith.constant 2.000000e-01 : f32
    %82 = vector.broadcast %cst_31 : f32 to vector<8x128xf32>
    %83 = arith.mulf %82, %81 : vector<8x128xf32>
    %84 = arith.maximumf %81, %83 : vector<8x128xf32>
    %c384 = arith.constant 384 : index
    %c0_32 = arith.constant 0 : index
    %85 = vector.load %arg1[%c384, %c0_32] : memref<512x128xf32, #tpu.memory_space<vmem>>, vector<128x128xf32>
    %c6 = arith.constant 6 : index
    %c0_33 = arith.constant 0 : index
    %86 = vector.load %arg2[%c6, %c0_33] : memref<8x128xf32, #tpu.memory_space<vmem>>, vector<1x128xf32>
    %cst_34 = arith.constant dense<0.000000e+00> : vector<8x128xf32>
    %87 = tpu.matmul %84, %85, %cst_34 {dimension_numbers = #tpu.dot_dimension_numbers<[1], [0], [0], [1], [0, 0, 1, 1], [], []>} : vector<8x128xf32>, vector<128x128xf32>, vector<8x128xf32> -> vector<8x128xf32>
    %88 = vector.broadcast %86 : vector<1x128xf32> to vector<8x128xf32>
    %89 = arith.addf %87, %88 : vector<8x128xf32>
    %c0_35 = arith.constant 0 : index
    %c0_36 = arith.constant 0 : index
    %90 = vector.load %arg3[%c0_35, %c0_36] : memref<8x128xf32, #tpu.memory_space<vmem>>, vector<8x128xf32>
    tpu.vector_store %arg3[%c0_35, %c0_36], %89 {strides = array<i32>} : memref<8x128xf32, #tpu.memory_space<vmem>>, vector<8x128xf32>,
    return
  }
}

</mosaic_0001>

<llo_original>
// kernel: tpu_custom_call.1
$region0: #{tpu_custom_call.1}
  #allocation0 [shape = 'u32[]', space=smem, size = 0x4, offset = 0x4, fixed_abs, tag = 'smem constant byte address 0x4 - core index']
  #allocation1 [shape = 'u32[144,128]{1,0:T(1,128)}', space=vmem, size = 0x12000, scoped, tag = 'internal scratch']
  %s0 = inlined_call_operand.hbm [shape: f32[8,128], index: 0, kind: input, shape index: {}]
  %s1 = inlined_call_operand.hbm [shape: f32[512,128], index: 1, kind: input, shape index: {}]
  %s2 = inlined_call_operand.hbm [shape: f32[8,128], index: 2, kind: input, shape index: {}]
  %s3 = inlined_call_operand.hbm [shape: f32[8,128], index: 3, kind: output, shape index: {}]
  %s4 = sld [smem:[#allocation0]]
  $region34: #{tpu_custom_call.1} parent=0
    _
  %s6 = ssub.s32 1, %s4
  %s7 = scalar_select 0, %s6, %s4
  $region1: #{tpu_custom_call.1} parent=0
    #allocation2 [shape = 'u8[4096]{0}', space=vmem, size = 0x1000, scoped, tag = 'input window, operand 0, single buffered']
    #allocation3 [shape = 's32[1]{0}', space=sflag, size = 0x4, scoped, tag = 'scoped memory for tpu_custom_call.1']
    #allocation4 [shape = 's32[1]{0}', space=sflag, size = 0x4, scoped, tag = 'scoped memory for tpu_custom_call.1']
    #allocation5 [shape = 'u8[262144]{0}', space=vmem, size = 0x40000, scoped, tag = 'input window, operand 1, single buffered']
    #allocation6 [shape = 's32[1]{0}', space=sflag, size = 0x4, scoped, tag = 'scoped memory for tpu_custom_call.1']
    #allocation7 [shape = 'u8[4096]{0}', space=vmem, size = 0x1000, scoped, tag = 'input window, operand 2, single buffered']
    #allocation8 [shape = 'u8[4096]{0}', space=vmem, size = 0x1000, scoped, tag = 'output window, operand 0, single buffered']
    %8 = vsyncpa [#allocation3], 0
    %9 = vsyncpa [#allocation6], 0
    %10 = vsyncpa [#allocation4], 0
    // Predicated region
    $region2: #{tpu_custom_call.1} parent=1 // pred_check
      _
    $region3: #{tpu_custom_call.1} parent=1 // pred_check_branch
      %12 = sbr.rel (0) target = $region5
    $region4: #{tpu_custom_call.1} parent=1 // pred_region
      %s14 = ssub.s32 128, 128
      %15 = vsyncadd [#allocation3], %s14
      %s17 = sshll.u32 [#allocation2], 4
      %s18 = int_to_ptr.vmem [resolvable:$true] %s17
      %20 = dma.hbm_to_vmem [thread:$0]  %s0, 128, %s18, [#allocation3]
    $region5: #{tpu_custom_call.1} parent=1 // pred_fallthru
      _
    // Predicated region
    $region6: #{tpu_custom_call.1} parent=1 // pred_check
      _
    $region7: #{tpu_custom_call.1} parent=1 // pred_check_branch
      %22 = sbr.rel (0) target = $region9
    $region8: #{tpu_custom_call.1} parent=1 // pred_region
      %s24 = ssub.s32 8192, 8192
      %25 = vsyncadd [#allocation6], %s24
      %s26 = sshll.u32 [#allocation5], 4
      %s27 = int_to_ptr.vmem [resolvable:$true] %s26
      %32 = dma.hbm_to_vmem [thread:$0]  %s1, 8192, %s27, [#allocation6], 128, 128, 8
    $region9: #{tpu_custom_call.1} parent=1 // pred_fallthru
      _
    // Predicated region
    $region10: #{tpu_custom_call.1} parent=1 // pred_check
      _
    $region11: #{tpu_custom_call.1} parent=1 // pred_check_branch
      %34 = sbr.rel (0) target = $region13
    $region12: #{tpu_custom_call.1} parent=1 // pred_region
      %s36 = ssub.s32 128, 128
      %37 = vsyncadd [#allocation6], %s36
      %s39 = sshll.u32 [#allocation7], 4
      %s40 = int_to_ptr.vmem [resolvable:$true] %s39
      %42 = dma.hbm_to_vmem [thread:$0]  %s2, 128, %s40, [#allocation6]
    $region13: #{tpu_custom_call.1} parent=1 // pred_fallthru
      _
    // Predicated region
    $region14: #{tpu_custom_call.1} parent=1 // pred_check
      _
    $region15: #{tpu_custom_call.1} parent=1 // pred_check_branch
      %44 = sbr.rel (0) target = $region17
    $region16: #{tpu_custom_call.1} parent=1 // pred_region
      %45 = dma.done [#allocation3], 128
    $region17: #{tpu_custom_call.1} parent=1 // pred_fallthru
      _
    // Predicated region
    $region18: #{tpu_custom_call.1} parent=1 // pred_check
      _
    $region19: #{tpu_custom_call.1} parent=1 // pred_check_branch
      %47 = sbr.rel (0) target = $region21
    $region20: #{tpu_custom_call.1} parent=1 // pred_region
      %48 = dma.done [#allocation6], 8192
    $region21: #{tpu_custom_call.1} parent=1 // pred_fallthru
      _
    // Predicated region
    $region22: #{tpu_custom_call.1} parent=1 // pred_check
      _
    $region23: #{tpu_custom_call.1} parent=1 // pred_check_branch
      %50 = sbr.rel (0) target = $region25
    $region24: #{tpu_custom_call.1} parent=1 // pred_region
      %51 = dma.done [#allocation6], 128
    $region25: #{tpu_custom_call.1} parent=1 // pred_fallthru
      _
    %v52 = vld [vmem:[#allocation2] sm:$0xff]
    %v53 = vld [vmem:[#allocation5] sm:$0xff]
    %v54 = vld [vmem:[#allocation5 + $0x8] sm:$0xff]
    %v55 = vld [vmem:[#allocation5 + $0x10] sm:$0xff]
    %v56 = vld [vmem:[#allocation5 + $0x18] sm:$0xff]
    %v57 = vld [vmem:[#allocation5 + $0x20] sm:$0xff]
    %v58 = vld [vmem:[#allocation5 + $0x28] sm:$0xff]
    %v59 = vld [vmem:[#allocation5 + $0x30] sm:$0xff]
    %v60 = vld [vmem:[#allocation5 + $0x38] sm:$0xff]
    %v61 = vld [vmem:[#allocation5 + $0x40] sm:$0xff]
    %v62 = vld [vmem:[#allocation5 + $0x48] sm:$0xff]
    %v63 = vld [vmem:[#allocation5 + $0x50] sm:$0xff]
    %v64 = vld [vmem:[#allocation5 + $0x58] sm:$0xff]
    %v65 = vld [vmem:[#allocation5 + $0x60] sm:$0xff]
    %v66 = vld [vmem:[#allocation5 + $0x68] sm:$0xff]
    %v67 = vld [vmem:[#allocation5 + $0x70] sm:$0xff]
    %v68 = vld [vmem:[#allocation5 + $0x78] sm:$0xff]
    %v69 = vld [vmem:[#allocation7] sm:$0x1]
    %v70 = vld [vmem:[#allocation7 + $0x1] sm:$0x1]
    %71 = vmatprep.subr.mxu0 0.0
    %72 = vmatpush1.msra.mxu0 %v53
    %73 = vmatprep.subr.mxu0 0.0
    %74 = vmatpush1.msra.mxu0 %v54
    %75 = vmatprep.subr.mxu0 0.0
    %76 = vmatpush1.msra.mxu0 %v55
    %77 = vmatprep.subr.mxu0 0.0
    %78 = vmatpush1.msra.mxu0 %v56
    %79 = vmatprep.subr.mxu0 0.0
    %80 = vmatpush1.msra.mxu0 %v57
    %81 = vmatprep.subr.mxu0 0.0
    %82 = vmatpush1.msra.mxu0 %v58
    %83 = vmatprep.subr.mxu0 0.0
    %84 = vmatpush1.msra.mxu0 %v59
    %85 = vmatprep.subr.mxu0 0.0
    %86 = vmatpush1.msra.mxu0 %v60
    %87 = vmatprep.subr.mxu0 0.0
    %88 = vmatpush1.msra.mxu0 %v61
    %89 = vmatprep.subr.mxu0 0.0
    %90 = vmatpush1.msra.mxu0 %v62
    %91 = vmatprep.subr.mxu0 0.0
    %92 = vmatpush1.msra.mxu0 %v63
    %93 = vmatprep.subr.mxu0 0.0
    %94 = vmatpush1.msra.mxu0 %v64
    %95 = vmatprep.subr.mxu0 0.0
    %96 = vmatpush1.msra.mxu0 %v65
    %97 = vmatprep.subr.mxu0 0.0
    %98 = vmatpush1.msra.mxu0 %v66
    %99 = vmatprep.subr.mxu0 0.0
    %100 = vmatpush1.msra.mxu0 %v67
    %101 = vmatprep.subr.mxu0 0.0
    %102 = vmatpush1.msra.mxu0 %v68
    %103 = vmatprep.subr.mxu0 0.0
    %104 = vmatpush1.msra.mxu0 0.0
    %105 = vmatprep.subr.mxu0 0.0
    %106 = vmatpush1.msra.mxu0 0.0
    %107 = vmatprep.subr.mxu0 0.0
    %108 = vmatpush1.msra.mxu0 0.0
    %109 = vmatprep.subr.mxu0 0.0
    %110 = vmatpush1.msra.mxu0 0.0
    %111 = vmatprep.subr.mxu0 0.0
    %112 = vmatpush1.msra.mxu0 0.0
    %113 = vmatprep.subr.mxu0 0.0
    %114 = vmatpush1.msra.mxu0 0.0
    %115 = vmatprep.subr.mxu0 0.0
    %116 = vmatpush1.msra.mxu0 0.0
    %117 = vmatprep.subr.mxu0 0.0
    %118 = vmatpush1.msra.mxu0 0.0
    %119 = vmatprep.subr.mxu0 0.0
    %120 = vmatpush1.msra.mxu0 0.0
    %121 = vmatprep.subr.mxu0 0.0
    %122 = vmatpush1.msra.mxu0 0.0
    %123 = vmatprep.subr.mxu0 0.0
    %124 = vmatpush1.msra.mxu0 0.0
    %125 = vmatprep.subr.mxu0 0.0
    %126 = vmatpush1.msra.mxu0 0.0
    %127 = vmatprep.subr.mxu0 0.0
    %128 = vmatpush1.msra.mxu0 0.0
    %129 = vmatprep.subr.mxu0 0.0
    %130 = vmatpush1.msra.mxu0 0.0
    %131 = vmatprep.subr.mxu0 0.0
    %132 = vmatpush1.msra.mxu0 0.0
    %133 = vmatprep.subr.mxu0 0.0
    %134 = vmatpush1.msra.mxu0 0.0
    %135 = vmatprep.mubr.f32.mxu0 0.0
    %136 = vmatmul.mubr.f32.gmra.mrb[0].mxu0 %v52
    %v137 = vpop.f32.mrb[0].mxu0
    %v138 = vadd.f32 0.0, %v137
    %v139 = vpop.f32.mrb[0].mxu0
    %140 = vdwg.mxu0
    %v141 = vrot.slane %v138, 4
    %v142 = vadd.f32 %v138, %v141
    %v143 = vrot.slane %v142, 2
    %v144 = vadd.f32 %v142, %v143
    %v145 = vrot.slane %v144, 1
    %v146 = vadd.f32 %v144, %v145
    %v147 = vrcp.pop 8.0
    %v148 = vmul.f32 %v146, %v147
    %v149 = vmul.f32 %v138, %v138
    %v150 = vrot.slane %v149, 4
    %v151 = vadd.f32 %v149, %v150
    %v152 = vrot.slane %v151, 2
    %v153 = vadd.f32 %v151, %v152
    %v154 = vrot.slane %v153, 1
    %v155 = vadd.f32 %v153, %v154
    %v156 = vmul.f32 %v155, %v147
    %v157 = vmul.f32 %v148, %v148
    %v158 = vsub.f32 %v156, %v157
    %v159 = vadd.f32 %v158, 1e-05
    %v160 = vrsqrt.pop %v159
    %v161 = vmul.f32 %v69, %v160
    %v162 = vmul.f32 %v148, %v161
    %v163 = vsub.f32 %v70, %v162
    %v164 = vlaneseq
    %v165 = vshrl.u32 %v164, 7
    %v166 = vsub.s32 0, %v165
    %v167 = vrot.slane %v161, %v166
    %v168 = vmul.f32 %v138, %v167
    %v169 = vlaneseq
    %v170 = vshrl.u32 %v169, 7
    %v171 = vsub.s32 0, %v170
    %v172 = vrot.slane %v163, %v171
    %v173 = vadd.f32 %v168, %v172
    %v174 = vmul.f32 %v173, 0.2
    %v175 = vmax.f32 %v173, %v174
    %v176 = vld [vmem:[#allocation5 + $0x80] sm:$0xff]
    %v177 = vld [vmem:[#allocation5 + $0x88] sm:$0xff]
    %v178 = vld [vmem:[#allocation5 + $0x90] sm:$0xff]
    %v179 = vld [vmem:[#allocation5 + $0x98] sm:$0xff]
    %v180 = vld [vmem:[#allocation5 + $0xa0] sm:$0xff]
    %v181 = vld [vmem:[#allocation5 + $0xa8] sm:$0xff]
    %v182 = vld [vmem:[#allocation5 + $0xb0] sm:$0xff]
    %v183 = vld [vmem:[#allocation5 + $0xb8] sm:$0xff]
    %v184 = vld [vmem:[#allocation5 + $0xc0] sm:$0xff]
    %v185 = vld [vmem:[#allocation5 + $0xc8] sm:$0xff]
    %v186 = vld [vmem:[#allocation5 + $0xd0] sm:$0xff]
    %v187 = vld [vmem:[#allocation5 + $0xd8] sm:$0xff]
    %v188 = vld [vmem:[#allocation5 + $0xe0] sm:$0xff]
    %v189 = vld [vmem:[#allocation5 + $0xe8] sm:$0xff]
    %v190 = vld [vmem:[#allocation5 + $0xf0] sm:$0xff]
    %v191 = vld [vmem:[#allocation5 + $0xf8] sm:$0xff]
    %v192 = vld [vmem:[#allocation7 + $0x2] sm:$0x1]
    %v193 = vld [vmem:[#allocation7 + $0x3] sm:$0x1]
    %194 = vmatprep.subr.mxu0 0.0
    %195 = vmatpush1.msra.mxu0 %v176
    %196 = vmatprep.subr.mxu0 0.0
    %197 = vmatpush1.msra.mxu0 %v177
    %198 = vmatprep.subr.mxu0 0.0
    %199 = vmatpush1.msra.mxu0 %v178
    %200 = vmatprep.subr.mxu0 0.0
    %201 = vmatpush1.msra.mxu0 %v179
    %202 = vmatprep.subr.mxu0 0.0
    %203 = vmatpush1.msra.mxu0 %v180
    %204 = vmatprep.subr.mxu0 0.0
    %205 = vmatpush1.msra.mxu0 %v181
    %206 = vmatprep.subr.mxu0 0.0
    %207 = vmatpush1.msra.mxu0 %v182
    %208 = vmatprep.subr.mxu0 0.0
    %209 = vmatpush1.msra.mxu0 %v183
    %210 = vmatprep.subr.mxu0 0.0
    %211 = vmatpush1.msra.mxu0 %v184
    %212 = vmatprep.subr.mxu0 0.0
    %213 = vmatpush1.msra.mxu0 %v185
    %214 = vmatprep.subr.mxu0 0.0
    %215 = vmatpush1.msra.mxu0 %v186
    %216 = vmatprep.subr.mxu0 0.0
    %217 = vmatpush1.msra.mxu0 %v187
    %218 = vmatprep.subr.mxu0 0.0
    %219 = vmatpush1.msra.mxu0 %v188
    %220 = vmatprep.subr.mxu0 0.0
    %221 = vmatpush1.msra.mxu0 %v189
    %222 = vmatprep.subr.mxu0 0.0
    %223 = vmatpush1.msra.mxu0 %v190
    %224 = vmatprep.subr.mxu0 0.0
    %225 = vmatpush1.msra.mxu0 %v191
    %226 = vmatprep.subr.mxu0 0.0
    %227 = vmatpush1.msra.mxu0 0.0
    %228 = vmatprep.subr.mxu0 0.0
    %229 = vmatpush1.msra.mxu0 0.0
    %230 = vmatprep.subr.mxu0 0.0
    %231 = vmatpush1.msra.mxu0 0.0
    %232 = vmatprep.subr.mxu0 0.0
    %233 = vmatpush1.msra.mxu0 0.0
    %234 = vmatprep.subr.mxu0 0.0
    %235 = vmatpush1.msra.mxu0 0.0
    %236 = vmatprep.subr.mxu0 0.0
    %237 = vmatpush1.msra.mxu0 0.0
    %238 = vmatprep.subr.mxu0 0.0
    %239 = vmatpush1.msra.mxu0 0.0
    %240 = vmatprep.subr.mxu0 0.0
    %241 = vmatpush1.msra.mxu0 0.0
    %242 = vmatprep.subr.mxu0 0.0
    %243 = vmatpush1.msra.mxu0 0.0
    %244 = vmatprep.subr.mxu0 0.0
    %245 = vmatpush1.msra.mxu0 0.0
    %246 = vmatprep.subr.mxu0 0.0
    %247 = vmatpush1.msra.mxu0 0.0
    %248 = vmatprep.subr.mxu0 0.0
    %249 = vmatpush1.msra.mxu0 0.0
    %250 = vmatprep.subr.mxu0 0.0
    %251 = vmatpush1.msra.mxu0 0.0
    %252 = vmatprep.subr.mxu0 0.0
    %253 = vmatpush1.msra.mxu0 0.0
    %254 = vmatprep.subr.mxu0 0.0
    %255 = vmatpush1.msra.mxu0 0.0
    %256 = vmatprep.subr.mxu0 0.0
    %257 = vmatpush1.msra.mxu0 0.0
    %258 = vmatprep.mubr.f32.mxu0 0.0
    %259 = vmatmul.mubr.f32.gmra.mrb[0].mxu0 %v175
    %v260 = vpop.f32.mrb[0].mxu0
    %v261 = vadd.f32 0.0, %v260
    %v262 = vpop.f32.mrb[0].mxu0
    %263 = vdwg.mxu0
    %v264 = vrot.slane %v261, 4
    %v265 = vadd.f32 %v261, %v264
    %v266 = vrot.slane %v265, 2
    %v267 = vadd.f32 %v265, %v266
    %v268 = vrot.slane %v267, 1
    %v269 = vadd.f32 %v267, %v268
    %v270 = vmul.f32 %v269, %v147
    %v271 = vmul.f32 %v261, %v261
    %v272 = vrot.slane %v271, 4
    %v273 = vadd.f32 %v271, %v272
    %v274 = vrot.slane %v273, 2
    %v275 = vadd.f32 %v273, %v274
    %v276 = vrot.slane %v275, 1
    %v277 = vadd.f32 %v275, %v276
    %v278 = vmul.f32 %v277, %v147
    %v279 = vmul.f32 %v270, %v270
    %v280 = vsub.f32 %v278, %v279
    %v281 = vadd.f32 %v280, 1e-05
    %v282 = vrsqrt.pop %v281
    %v283 = vmul.f32 %v192, %v282
    %v284 = vmul.f32 %v270, %v283
    %v285 = vsub.f32 %v193, %v284
    %v286 = vlaneseq
    %v287 = vshrl.u32 %v286, 7
    %v288 = vsub.s32 0, %v287
    %v289 = vrot.slane %v283, %v288
    %v290 = vmul.f32 %v261, %v289
    %v291 = vlaneseq
    %v292 = vshrl.u32 %v291, 7
    %v293 = vsub.s32 0, %v292
    %v294 = vrot.slane %v285, %v293
    %v295 = vadd.f32 %v290, %v294
    %v296 = vmul.f32 %v295, 0.2
    %v297 = vmax.f32 %v295, %v296
    %v298 = vld [vmem:[#allocation5 + $0x100] sm:$0xff]
    %v299 = vld [vmem:[#allocation5 + $0x108] sm:$0xff]
    %v300 = vld [vmem:[#allocation5 + $0x110] sm:$0xff]
    %v301 = vld [vmem:[#allocation5 + $0x118] sm:$0xff]
    %v302 = vld [vmem:[#allocation5 + $0x120] sm:$0xff]
    %v303 = vld [vmem:[#allocation5 + $0x128] sm:$0xff]
    %v304 = vld [vmem:[#allocation5 + $0x130] sm:$0xff]
    %v305 = vld [vmem:[#allocation5 + $0x138] sm:$0xff]
    %v306 = vld [vmem:[#allocation5 + $0x140] sm:$0xff]
    %v307 = vld [vmem:[#allocation5 + $0x148] sm:$0xff]
    %v308 = vld [vmem:[#allocation5 + $0x150] sm:$0xff]
    %v309 = vld [vmem:[#allocation5 + $0x158] sm:$0xff]
    %v310 = vld [vmem:[#allocation5 + $0x160] sm:$0xff]
    %v311 = vld [vmem:[#allocation5 + $0x168] sm:$0xff]
    %v312 = vld [vmem:[#allocation5 + $0x170] sm:$0xff]
    %v313 = vld [vmem:[#allocation5 + $0x178] sm:$0xff]
    %v314 = vld [vmem:[#allocation7 + $0x4] sm:$0x1]
    %v315 = vld [vmem:[#allocation7 + $0x5] sm:$0x1]
    %316 = vmatprep.subr.mxu0 0.0
    %317 = vmatpush1.msra.mxu0 %v298
    %318 = vmatprep.subr.mxu0 0.0
    %319 = vmatpush1.msra.mxu0 %v299
    %320 = vmatprep.subr.mxu0 0.0
    %321 = vmatpush1.msra.mxu0 %v300
    %322 = vmatprep.subr.mxu0 0.0
    %323 = vmatpush1.msra.mxu0 %v301
    %324 = vmatprep.subr.mxu0 0.0
    %325 = vmatpush1.msra.mxu0 %v302
    %326 = vmatprep.subr.mxu0 0.0
    %327 = vmatpush1.msra.mxu0 %v303
    %328 = vmatprep.subr.mxu0 0.0
    %329 = vmatpush1.msra.mxu0 %v304
    %330 = vmatprep.subr.mxu0 0.0
    %331 = vmatpush1.msra.mxu0 %v305
    %332 = vmatprep.subr.mxu0 0.0
    %333 = vmatpush1.msra.mxu0 %v306
    %334 = vmatprep.subr.mxu0 0.0
    %335 = vmatpush1.msra.mxu0 %v307
    %336 = vmatprep.subr.mxu0 0.0
    %337 = vmatpush1.msra.mxu0 %v308
    %338 = vmatprep.subr.mxu0 0.0
    %339 = vmatpush1.msra.mxu0 %v309
    %340 = vmatprep.subr.mxu0 0.0
    %341 = vmatpush1.msra.mxu0 %v310
    %342 = vmatprep.subr.mxu0 0.0
    %343 = vmatpush1.msra.mxu0 %v311
    %344 = vmatprep.subr.mxu0 0.0
    %345 = vmatpush1.msra.mxu0 %v312
    %346 = vmatprep.subr.mxu0 0.0
    %347 = vmatpush1.msra.mxu0 %v313
    %348 = vmatprep.subr.mxu0 0.0
    %349 = vmatpush1.msra.mxu0 0.0
    %350 = vmatprep.subr.mxu0 0.0
    %351 = vmatpush1.msra.mxu0 0.0
    %352 = vmatprep.subr.mxu0 0.0
    %353 = vmatpush1.msra.mxu0 0.0
    %354 = vmatprep.subr.mxu0 0.0
    %355 = vmatpush1.msra.mxu0 0.0
    %356 = vmatprep.subr.mxu0 0.0
    %357 = vmatpush1.msra.mxu0 0.0
    %358 = vmatprep.subr.mxu0 0.0
    %359 = vmatpush1.msra.mxu0 0.0
    %360 = vmatprep.subr.mxu0 0.0
    %361 = vmatpush1.msra.mxu0 0.0
    %362 = vmatprep.subr.mxu0 0.0
    %363 = vmatpush1.msra.mxu0 0.0
    %364 = vmatprep.subr.mxu0 0.0
    %365 = vmatpush1.msra.mxu0 0.0
    %366 = vmatprep.subr.mxu0 0.0
    %367 = vmatpush1.msra.mxu0 0.0
    %368 = vmatprep.subr.mxu0 0.0
    %369 = vmatpush1.msra.mxu0 0.0
    %370 = vmatprep.subr.mxu0 0.0
    %371 = vmatpush1.msra.mxu0 0.0
    %372 = vmatprep.subr.mxu0 0.0
    %373 = vmatpush1.msra.mxu0 0.0
    %374 = vmatprep.subr.mxu0 0.0
    %375 = vmatpush1.msra.mxu0 0.0
    %376 = vmatprep.subr.mxu0 0.0
    %377 = vmatpush1.msra.mxu0 0.0
    %378 = vmatprep.subr.mxu0 0.0
    %379 = vmatpush1.msra.mxu0 0.0
    %380 = vmatprep.mubr.f32.mxu0 0.0
    %381 = vmatmul.mubr.f32.gmra.mrb[0].mxu0 %v297
    %v382 = vpop.f32.mrb[0].mxu0
    %v383 = vadd.f32 0.0, %v382
    %v384 = vpop.f32.mrb[0].mxu0
    %385 = vdwg.mxu0
    %v386 = vrot.slane %v383, 4
    %v387 = vadd.f32 %v383, %v386
    %v388 = vrot.slane %v387, 2
    %v389 = vadd.f32 %v387, %v388
    %v390 = vrot.slane %v389, 1
    %v391 = vadd.f32 %v389, %v390
    %v392 = vmul.f32 %v391, %v147
    %v393 = vmul.f32 %v383, %v383
    %v394 = vrot.slane %v393, 4
    %v395 = vadd.f32 %v393, %v394
    %v396 = vrot.slane %v395, 2
    %v397 = vadd.f32 %v395, %v396
    %v398 = vrot.slane %v397, 1
    %v399 = vadd.f32 %v397, %v398
    %v400 = vmul.f32 %v399, %v147
    %v401 = vmul.f32 %v392, %v392
    %v402 = vsub.f32 %v400, %v401
    %v403 = vadd.f32 %v402, 1e-05
    %v404 = vrsqrt.pop %v403
    %v405 = vmul.f32 %v314, %v404
    %v406 = vmul.f32 %v392, %v405
    %v407 = vsub.f32 %v315, %v406
    %v408 = vlaneseq
    %v409 = vshrl.u32 %v408, 7
    %v410 = vsub.s32 0, %v409
    %v411 = vrot.slane %v405, %v410
    %v412 = vmul.f32 %v383, %v411
    %v413 = vlaneseq
    %v414 = vshrl.u32 %v413, 7
    %v415 = vsub.s32 0, %v414
    %v416 = vrot.slane %v407, %v415
    %v417 = vadd.f32 %v412, %v416
    %v418 = vmul.f32 %v417, 0.2
    %v419 = vmax.f32 %v417, %v418
    %v420 = vld [vmem:[#allocation5 + $0x180] sm:$0xff]
    %v421 = vld [vmem:[#allocation5 + $0x188] sm:$0xff]
    %v422 = vld [vmem:[#allocation5 + $0x190] sm:$0xff]
    %v423 = vld [vmem:[#allocation5 + $0x198] sm:$0xff]
    %v424 = vld [vmem:[#allocation5 + $0x1a0] sm:$0xff]
    %v425 = vld [vmem:[#allocation5 + $0x1a8] sm:$0xff]
    %v426 = vld [vmem:[#allocation5 + $0x1b0] sm:$0xff]
    %v427 = vld [vmem:[#allocation5 + $0x1b8] sm:$0xff]
    %v428 = vld [vmem:[#allocation5 + $0x1c0] sm:$0xff]
    %v429 = vld [vmem:[#allocation5 + $0x1c8] sm:$0xff]
    %v430 = vld [vmem:[#allocation5 + $0x1d0] sm:$0xff]
    %v431 = vld [vmem:[#allocation5 + $0x1d8] sm:$0xff]
    %v432 = vld [vmem:[#allocation5 + $0x1e0] sm:$0xff]
    %v433 = vld [vmem:[#allocation5 + $0x1e8] sm:$0xff]
    %v434 = vld [vmem:[#allocation5 + $0x1f0] sm:$0xff]
    %v435 = vld [vmem:[#allocation5 + $0x1f8] sm:$0xff]
    %v436 = vld [vmem:[#allocation7 + $0x6] sm:$0x1]
    %v437 = vlaneseq
    %v438 = vshrl.u32 %v437, 7
    %v439 = vsub.s32 0, %v438
    %v440 = vrot.slane %v436, %v439
    %441 = vmatprep.subr.mxu0 0.0
    %442 = vmatpush1.msra.mxu0 %v420
    %443 = vmatprep.subr.mxu0 0.0
    %444 = vmatpush1.msra.mxu0 %v421
    %445 = vmatprep.subr.mxu0 0.0
    %446 = vmatpush1.msra.mxu0 %v422
    %447 = vmatprep.subr.mxu0 0.0
    %448 = vmatpush1.msra.mxu0 %v423
    %449 = vmatprep.subr.mxu0 0.0
    %450 = vmatpush1.msra.mxu0 %v424
    %451 = vmatprep.subr.mxu0 0.0
    %452 = vmatpush1.msra.mxu0 %v425
    %453 = vmatprep.subr.mxu0 0.0
    %454 = vmatpush1.msra.mxu0 %v426
    %455 = vmatprep.subr.mxu0 0.0
    %456 = vmatpush1.msra.mxu0 %v427
    %457 = vmatprep.subr.mxu0 0.0
    %458 = vmatpush1.msra.mxu0 %v428
    %459 = vmatprep.subr.mxu0 0.0
    %460 = vmatpush1.msra.mxu0 %v429
    %461 = vmatprep.subr.mxu0 0.0
    %462 = vmatpush1.msra.mxu0 %v430
    %463 = vmatprep.subr.mxu0 0.0
    %464 = vmatpush1.msra.mxu0 %v431
    %465 = vmatprep.subr.mxu0 0.0
    %466 = vmatpush1.msra.mxu0 %v432
    %467 = vmatprep.subr.mxu0 0.0
    %468 = vmatpush1.msra.mxu0 %v433
    %469 = vmatprep.subr.mxu0 0.0
    %470 = vmatpush1.msra.mxu0 %v434
    %471 = vmatprep.subr.mxu0 0.0
    %472 = vmatpush1.msra.mxu0 %v435
    %473 = vmatprep.subr.mxu0 0.0
    %474 = vmatpush1.msra.mxu0 0.0
    %475 = vmatprep.subr.mxu0 0.0
    %476 = vmatpush1.msra.mxu0 0.0
    %477 = vmatprep.subr.mxu0 0.0
    %478 = vmatpush1.msra.mxu0 0.0
    %479 = vmatprep.subr.mxu0 0.0
    %480 = vmatpush1.msra.mxu0 0.0
    %481 = vmatprep.subr.mxu0 0.0
    %482 = vmatpush1.msra.mxu0 0.0
    %483 = vmatprep.subr.mxu0 0.0
    %484 = vmatpush1.msra.mxu0 0.0
    %485 = vmatprep.subr.mxu0 0.0
    %486 = vmatpush1.msra.mxu0 0.0
    %487 = vmatprep.subr.mxu0 0.0
    %488 = vmatpush1.msra.mxu0 0.0
    %489 = vmatprep.subr.mxu0 0.0
    %490 = vmatpush1.msra.mxu0 0.0
    %491 = vmatprep.subr.mxu0 0.0
    %492 = vmatpush1.msra.mxu0 0.0
    %493 = vmatprep.subr.mxu0 0.0
    %494 = vmatpush1.msra.mxu0 0.0
    %495 = vmatprep.subr.mxu0 0.0
    %496 = vmatpush1.msra.mxu0 0.0
    %497 = vmatprep.subr.mxu0 0.0
    %498 = vmatpush1.msra.mxu0 0.0
    %499 = vmatprep.subr.mxu0 0.0
    %500 = vmatpush1.msra.mxu0 0.0
    %501 = vmatprep.subr.mxu0 0.0
    %502 = vmatpush1.msra.mxu0 0.0
    %503 = vmatprep.subr.mxu0 0.0
    %504 = vmatpush1.msra.mxu0 0.0
    %505 = vmatprep.mubr.f32.mxu0 0.0
    %506 = vmatmul.mubr.f32.gmra.mrb[0].mxu0 %v419
    %v507 = vpop.f32.mrb[0].mxu0
    %v508 = vadd.f32 %v440, %v507
    %v509 = vpop.f32.mrb[0].mxu0
    %510 = vdwg.mxu0
    %511 = vst [vmem:[#allocation8] sm:$0xff] %v508
    // Predicated region
    $region26: #{tpu_custom_call.1} parent=1 // pred_check
      _
    $region27: #{tpu_custom_call.1} parent=1 // pred_check_branch
      %513 = sbr.rel (0) target = $region29
    $region28: #{tpu_custom_call.1} parent=1 // pred_region
      %s515 = ssub.s32 128, 128
      %516 = vsyncadd [#allocation4], %s515
      %s518 = sshll.u32 [#allocation8], 4
      %s519 = int_to_ptr.vmem [resolvable:$true] %s518
      %521 = dma.vmem_to_hbm [thread:$0]  %s519, 128, %s3, [#allocation4]
    $region29: #{tpu_custom_call.1} parent=1 // pred_fallthru
      _
    // Predicated region
    $region30: #{tpu_custom_call.1} parent=1 // pred_check
      _
    $region31: #{tpu_custom_call.1} parent=1 // pred_check_branch
      %523 = sbr.rel (0) target = $region33
    $region32: #{tpu_custom_call.1} parent=1 // pred_region
      %524 = dma.done [#allocation4], 128
    $region33: #{tpu_custom_call.1} parent=1 // pred_fallthru
      _
    %525 = vsyncpa [#allocation3], 1
    %526 = vsyncpa [#allocation6], 1
    %527 = vsyncpa [#allocation4], 1

</llo_original>
